<compile_context>
chip_gen: v6e
topology: v6e:2x2x1
jax: 0.10.0
libtpu: 0.0.40
codegen_flags: <defaults>
</compile_context>

<pallas_src>
import jax
import jax.numpy as jnp
import numpy as np
from jax import lax
from jax.experimental import pallas as pl
from jax.experimental.pallas import tpu as pltpu

# ----- module hyper-parameters ("args") --------------------------------------
RNN_HIDDEN_DIM   = 32
N_ACTIONS        = 5
N_AGENTS         = 3
STATE_SHAPE      = 24
QTRAN_HIDDEN_DIM = 64
EPISODE_NUM      = 2
MAX_EPISODE_LEN  = 8
B_INIT_VALUE     = 0.01

AE = RNN_HIDDEN_DIM + N_ACTIONS          # per-agent encoder width (37)


# ----- Pallas kernel ---------------------------------------------------------
def qtran_qbase_kernel(eh_ref, act_ref, st_ref,
                       w1h_ref, w1a_ref, b1t_ref,
                       w2s_ref, b2n_ref,
                       wq1s_ref, wq1e_ref, bq1_ref,
                       wq2_ref, bq2_ref,
                       wq3_ref, bq3_ref,
                       wq4r_ref, bq4_ref,
                       out_ref):
    f32, bf16 = jnp.float32, jnp.bfloat16
    bm = eh_ref.shape[0]

    # --- encoder layer 1 for ALL agents in one pass (block-diagonal weights;
    #     hidden-rows and action-rows split so no concat is needed anywhere).
    h = jnp.dot(eh_ref[...].astype(bf16), w1h_ref[...], preferred_element_type=f32)
    h = h + jnp.dot(act_ref[...].astype(bf16), w1a_ref[...], preferred_element_type=f32)
    h = jnp.maximum(h + b1t_ref[...], 0.0)                                  # (bm, N*AE)

    # --- encoder layer 2 + agent sum fused into ONE dot with the stacked W2:
    #     sum_a(relu_a @ W2 + b2) == [relu_0|relu_1|relu_2] @ [W2;W2;W2] + N*b2
    enc = jnp.dot(h.astype(bf16), w2s_ref[...],
                  preferred_element_type=f32) + b2n_ref[...]                # (bm, AE)

    # --- q MLP.  cat([state, enc]) @ Wq1 == state @ Wq1_s + enc @ Wq1_e.
    h1 = jnp.maximum(
        jnp.dot(st_ref[...].astype(bf16), wq1s_ref[...], preferred_element_type=f32)
        + jnp.dot(enc.astype(bf16), wq1e_ref[...], preferred_element_type=f32)
        + bq1_ref[...], 0.0)
    h2 = jnp.maximum(
        jnp.dot(h1.astype(bf16), wq2_ref[...], preferred_element_type=f32) + bq2_ref[...], 0.0)
    h3 = jnp.maximum(
        jnp.dot(h2.astype(bf16), wq3_ref[...], preferred_element_type=f32) + bq3_ref[...], 0.0)

    # --- final width-1 projection as an NT matmul so the result is already
    #     lane-dense (batch on lanes):  (1,64) x (bm,64)^T -> (1, bm).
    q_row = lax.dot_general(
        wq4r_ref[...], h3.astype(bf16),
        dimension_numbers=(((1,), (1,)), ((), ())),
        preferred_element_type=f32) + bq4_ref[...]                          # (1, bm)

    out_ref[...] = q_row.reshape(1, 1, bm).astype(out_ref.dtype)


# ----- tiling policy ---------------------------------------------------------
def _pick_bm(et, cap=1024):
    """Batch-tile size.  Small problems: one step (per-step overhead dominates,
    tiles are tiny).  Large problems: multiple-of-128 tiles targeting >=4 grid
    steps so both v7x TensorCores get >=2 pipelined steps each."""
    if et <= 512:
        return max(8, ((min(et, cap) + 7) // 8) * 8)
    target = min(cap, max(128, et // 4))
    return max(128, (target // 128) * 128)


# ----- wrapper ---------------------------------------------------------------
def qtran_qbase_forward(state, eval_hiddens, actions, params, *, bm_cap=1024):
    E, T, N, _ = actions.shape
    ET = E * T
    H, A = RNN_HIDDEN_DIM, N_ACTIONS

    bm = _pick_bm(ET, cap=bm_cap)
    grid = pl.cdiv(ET, bm)
    ET_pad = grid * bm

    # ---- activations: contiguous reshapes only (no HBM transpose / concat) --
    eh2d = eval_hiddens.reshape(ET, N * H)      # (ET, 96)
    act2d = actions.reshape(ET, N * A)          # (ET, 15)
    st2d = state.reshape(ET, STATE_SHAPE)       # (ET, 24)
    if ET_pad != ET:
        pad = ET_pad - ET
        eh2d = jnp.pad(eh2d, ((0, pad), (0, 0)))
        act2d = jnp.pad(act2d, ((0, pad), (0, 0)))
        st2d = jnp.pad(st2d, ((0, pad), (0, 0)))

    # ---- packed encoder weights (tiny; off-diagonal blocks exactly zero) ----
    bf16 = jnp.bfloat16
    w1 = params["w1"]
    w1_h, w1_a = w1[:H, :], w1[H:, :]
    W1h = jnp.zeros((N * H, N * AE), jnp.float32)
    W1a = jnp.zeros((N * A, N * AE), jnp.float32)
    for a in range(N):
        W1h = W1h.at[a * H:(a + 1) * H, a * AE:(a + 1) * AE].set(w1_h)
        W1a = W1a.at[a * A:(a + 1) * A, a * AE:(a + 1) * AE].set(w1_a)
    W2s = jnp.concatenate([params["w2"]] * N, axis=0)       # (N*AE, AE)
    b1t = jnp.tile(params["b1"], (1, N))                    # (1, N*AE)
    b2n = params["b2"] * jnp.float32(N)                     # linearity trick
    wq4_row = params["wq4"].T                                # (1, QTRAN_HIDDEN_DIM)

    param_list = [
        W1h.astype(bf16), W1a.astype(bf16), b1t,
        W2s.astype(bf16), b2n,
        params["wq1s"].astype(bf16), params["wq1e"].astype(bf16), params["bq1"],
        params["wq2"].astype(bf16), params["bq2"],
        params["wq3"].astype(bf16), params["bq3"],
        wq4_row.astype(bf16), params["bq4"],
    ]

    def full2d(arr):
        return pl.BlockSpec(arr.shape, lambda i: (0, 0))

    in_specs = [
        pl.BlockSpec((bm, N * H), lambda i: (i, 0)),         # eval_hiddens
        pl.BlockSpec((bm, N * A), lambda i: (i, 0)),         # actions (one-hot)
        pl.BlockSpec((bm, STATE_SHAPE), lambda i: (i, 0)),   # state
    ] + [full2d(p) for p in param_list]

    # Lane-dense output: one (1, bm) row per grid step.
    out_specs = pl.BlockSpec((1, 1, bm), lambda i: (i, 0, 0))

    q_rows = pl.pallas_call(
        qtran_qbase_kernel,
        out_shape=jax.ShapeDtypeStruct((grid, 1, bm), jnp.float32),
        grid_spec=pltpu.PrefetchScalarGridSpec(
            num_scalar_prefetch=0,
            grid=(grid,),
            in_specs=in_specs,
            out_specs=out_specs,
        ),
        compiler_params=pltpu.CompilerParams(
            dimension_semantics=("parallel",)),
    )(eh2d, act2d, st2d, *param_list)

    # TODO(synk): if bm_cap is raised past ~1024 on v5e, set
    # pltpu.CompilerParams(vmem_limit_bytes=...) explicitly (16 MiB scoped default).
    return q_rows.reshape(ET_pad, 1)[:ET]


# ----- deterministic parameter init ------------------------------------------
def init_params(key):
    ks = jax.random.split(key, 8)
    scale = 0.1
    return {
        "w1":   jax.random.normal(ks[0], (AE, AE), jnp.float32) * scale,
        "b1":   jnp.full((1, AE), B_INIT_VALUE, jnp.float32),
        "w2":   jax.random.normal(ks[1], (AE, AE), jnp.float32) * scale,
        "b2":   jnp.full((1, AE), B_INIT_VALUE, jnp.float32),
        # first q-layer weight split: [state part ; encoding part]
        "wq1s": jax.random.normal(ks[2], (STATE_SHAPE, QTRAN_HIDDEN_DIM), jnp.float32) * scale,
        "wq1e": jax.random.normal(ks[3], (AE, QTRAN_HIDDEN_DIM), jnp.float32) * scale,
        "bq1":  jnp.full((1, QTRAN_HIDDEN_DIM), B_INIT_VALUE, jnp.float32),
        "wq2":  jax.random.normal(ks[4], (QTRAN_HIDDEN_DIM, QTRAN_HIDDEN_DIM), jnp.float32) * scale,
        "bq2":  jnp.full((1, QTRAN_HIDDEN_DIM), B_INIT_VALUE, jnp.float32),
        "wq3":  jax.random.normal(ks[5], (QTRAN_HIDDEN_DIM, QTRAN_HIDDEN_DIM), jnp.float32) * scale,
        "bq3":  jnp.full((1, QTRAN_HIDDEN_DIM), B_INIT_VALUE, jnp.float32),
        "wq4":  jax.random.normal(ks[6], (QTRAN_HIDDEN_DIM, 1), jnp.float32) * scale,
        "bq4":  jnp.full((1, 1), B_INIT_VALUE, jnp.float32),
    }


# ----- pure-JAX f32 reference (mirrors the PyTorch forward) ------------------
def reference_forward(state, eval_hiddens, actions, params):
    E, T, N, _ = actions.shape
    ET = E * T
    ha = jnp.concatenate([eval_hiddens, actions], axis=-1).reshape(-1, AE)
    h = jnp.maximum(ha @ params["w1"] + params["b1"], 0.0)
    enc = (h @ params["w2"] + params["b2"]).reshape(ET, N, AE).sum(axis=-2)
    wq1 = jnp.concatenate([params["wq1s"], params["wq1e"]], axis=0)
    inp = jnp.concatenate([state.reshape(ET, -1), enc], axis=-1)   # .detach() is a forward no-op
    h1 = jnp.maximum(inp @ wq1 + params["bq1"], 0.0)
    h2 = jnp.maximum(h1 @ params["wq2"] + params["bq2"], 0.0)
    h3 = jnp.maximum(h2 @ params["wq3"] + params["bq3"], 0.0)
    return h3 @ params["wq4"] + params["bq4"]


if __name__ == "__main__":
    key = jax.random.PRNGKey(0)
    k_state, k_hid, k_act = jax.random.split(key, 3)

    state = jax.random.normal(
        k_state, (EPISODE_NUM, MAX_EPISODE_LEN, STATE_SHAPE), jnp.float32)
    eval_hiddens = jax.random.normal(
        k_hid, (EPISODE_NUM, MAX_EPISODE_LEN, N_AGENTS, RNN_HIDDEN_DIM), jnp.float32)
    act_idx = jax.random.randint(
        k_act, (EPISODE_NUM, MAX_EPISODE_LEN, N_AGENTS), 0, N_ACTIONS)
    actions = jax.nn.one_hot(act_idx, N_ACTIONS, dtype=jnp.float32)

    params = init_params(jax.random.PRNGKey(42))

    q = qtran_qbase_forward(state, eval_hiddens, actions, params)
    q = jax.block_until_ready(q)

    q_ref = reference_forward(state, eval_hiddens, actions, params)
    # bf16 matmul operands with f32 accumulation -> relaxed tolerance vs f32 ref.
    np.testing.assert_allclose(np.asarray(q), np.asarray(q_ref), rtol=3e-2, atol=3e-2)
    assert q.shape == (EPISODE_NUM * MAX_EPISODE_LEN, 1)

    print("KERNEL_OK")
</pallas_src>

<mosaic_0001>
module attributes {stable_mosaic.version = 11 : i64} {
  func.func @qtran_qbase_kernel(%arg0: i32, %arg1: memref<16x96xf32, #tpu.memory_space<vmem>>, %arg2: memref<16x15xf32, #tpu.memory_space<vmem>>, %arg3: memref<16x24xf32, #tpu.memory_space<vmem>>, %arg4: memref<96x111xbf16, #tpu.memory_space<vmem>>, %arg5: memref<15x111xbf16, #tpu.memory_space<vmem>>, %arg6: memref<1x111xf32, #tpu.memory_space<vmem>>, %arg7: memref<111x37xbf16, #tpu.memory_space<vmem>>, %arg8: memref<1x37xf32, #tpu.memory_space<vmem>>, %arg9: memref<24x64xbf16, #tpu.memory_space<vmem>>, %arg10: memref<37x64xbf16, #tpu.memory_space<vmem>>, %arg11: memref<1x64xf32, #tpu.memory_space<vmem>>, %arg12: memref<64x64xbf16, #tpu.memory_space<vmem>>, %arg13: memref<1x64xf32, #tpu.memory_space<vmem>>, %arg14: memref<64x64xbf16, #tpu.memory_space<vmem>>, %arg15: memref<1x64xf32, #tpu.memory_space<vmem>>, %arg16: memref<1x64xbf16, #tpu.memory_space<vmem>>, %arg17: memref<1x1xf32, #tpu.memory_space<vmem>>, %arg18: memref<1x1x16xf32, #tpu.memory_space<vmem>>) attributes {dimension_semantics = [#tpu.dimension_semantics<parallel>], iteration_bounds = array<i64: 1>, scalar_prefetch = 0 : i64, scratch_operands = 0 : i64, tpu.core_type = #tpu.core_type<tc>, window_params = [{transform_indices = @transform_0, window_bounds = array<i64: 16, 96>}, {transform_indices = @transform_1, window_bounds = array<i64: 16, 15>}, {transform_indices = @transform_2, window_bounds = array<i64: 16, 24>}, {pipeline_mode = #tpu.pipeline_mode<synchronous>, transform_indices = @transform_3, window_bounds = array<i64: 96, 111>}, {pipeline_mode = #tpu.pipeline_mode<synchronous>, transform_indices = @transform_4, window_bounds = array<i64: 15, 111>}, {pipeline_mode = #tpu.pipeline_mode<synchronous>, transform_indices = @transform_5, window_bounds = array<i64: 1, 111>}, {pipeline_mode = #tpu.pipeline_mode<synchronous>, transform_indices = @transform_6, window_bounds = array<i64: 111, 37>}, {pipeline_mode = #tpu.pipeline_mode<synchronous>, transform_indices = @transform_7, window_bounds = array<i64: 1, 37>}, {pipeline_mode = #tpu.pipeline_mode<synchronous>, transform_indices = @transform_8, window_bounds = array<i64: 24, 64>}, {pipeline_mode = #tpu.pipeline_mode<synchronous>, transform_indices = @transform_9, window_bounds = array<i64: 37, 64>}, {pipeline_mode = #tpu.pipeline_mode<synchronous>, transform_indices = @transform_10, window_bounds = array<i64: 1, 64>}, {pipeline_mode = #tpu.pipeline_mode<synchronous>, transform_indices = @transform_11, window_bounds = array<i64: 64, 64>}, {pipeline_mode = #tpu.pipeline_mode<synchronous>, transform_indices = @transform_12, window_bounds = array<i64: 1, 64>}, {pipeline_mode = #tpu.pipeline_mode<synchronous>, transform_indices = @transform_13, window_bounds = array<i64: 64, 64>}, {pipeline_mode = #tpu.pipeline_mode<synchronous>, transform_indices = @transform_14, window_bounds = array<i64: 1, 64>}, {pipeline_mode = #tpu.pipeline_mode<synchronous>, transform_indices = @transform_15, window_bounds = array<i64: 1, 64>}, {pipeline_mode = #tpu.pipeline_mode<synchronous>, transform_indices = @transform_16, window_bounds = array<i64: 1, 1>}, {transform_indices = @transform_17, window_bounds = array<i64: 1, 1, 16>}]} {
    %c0 = arith.constant 0 : index
    %c0_0 = arith.constant 0 : index
    %0 = vector.load %arg1[%c0, %c0_0] : memref<16x96xf32, #tpu.memory_space<vmem>>, vector<16x96xf32>
    %1 = arith.truncf %0 : vector<16x96xf32> to vector<16x96xbf16>
    %c0_1 = arith.constant 0 : index
    %c0_2 = arith.constant 0 : index
    %2 = vector.load %arg4[%c0_1, %c0_2] : memref<96x111xbf16, #tpu.memory_space<vmem>>, vector<96x111xbf16>
    %cst = arith.constant dense<0.000000e+00> : vector<16x111xf32>
    %3 = tpu.matmul %1, %2, %cst {dimension_numbers = #tpu.dot_dimension_numbers<[1], [0], [0], [1], [0, 0, 1, 1], [], []>} : vector<16x96xbf16>, vector<96x111xbf16>, vector<16x111xf32> -> vector<16x111xf32>
    %c0_3 = arith.constant 0 : index
    %c0_4 = arith.constant 0 : index
    %4 = vector.load %arg2[%c0_3, %c0_4] : memref<16x15xf32, #tpu.memory_space<vmem>>, vector<16x15xf32>
    %5 = arith.truncf %4 : vector<16x15xf32> to vector<16x15xbf16>
    %c0_5 = arith.constant 0 : index
    %c0_6 = arith.constant 0 : index
    %6 = vector.load %arg5[%c0_5, %c0_6] : memref<15x111xbf16, #tpu.memory_space<vmem>>, vector<15x111xbf16>
    %cst_7 = arith.constant dense<0.000000e+00> : vector<16x111xf32>
    %7 = tpu.matmul %5, %6, %cst_7 {dimension_numbers = #tpu.dot_dimension_numbers<[1], [0], [0], [1], [0, 0, 1, 1], [], []>} : vector<16x15xbf16>, vector<15x111xbf16>, vector<16x111xf32> -> vector<16x111xf32>
    %8 = arith.addf %3, %7 : vector<16x111xf32>
    %c0_8 = arith.constant 0 : index
    %c0_9 = arith.constant 0 : index
    %9 = vector.load %arg6[%c0_8, %c0_9] : memref<1x111xf32, #tpu.memory_space<vmem>>, vector<1x111xf32>
    %10 = vector.broadcast %9 : vector<1x111xf32> to vector<16x111xf32>
    %11 = arith.addf %8, %10 : vector<16x111xf32>
    %cst_10 = arith.constant 0.000000e+00 : f32
    %12 = vector.broadcast %cst_10 : f32 to vector<16x111xf32>
    %13 = arith.maximumf %11, %12 : vector<16x111xf32>
    %14 = arith.truncf %13 : vector<16x111xf32> to vector<16x111xbf16>
    %c0_11 = arith.constant 0 : index
    %c0_12 = arith.constant 0 : index
    %15 = vector.load %arg7[%c0_11, %c0_12] : memref<111x37xbf16, #tpu.memory_space<vmem>>, vector<111x37xbf16>
    %cst_13 = arith.constant dense<0.000000e+00> : vector<16x37xf32>
    %16 = tpu.matmul %14, %15, %cst_13 {dimension_numbers = #tpu.dot_dimension_numbers<[1], [0], [0], [1], [0, 0, 1, 1], [], []>} : vector<16x111xbf16>, vector<111x37xbf16>, vector<16x37xf32> -> vector<16x37xf32>
    %c0_14 = arith.constant 0 : index
    %c0_15 = arith.constant 0 : index
    %17 = vector.load %arg8[%c0_14, %c0_15] : memref<1x37xf32, #tpu.memory_space<vmem>>, vector<1x37xf32>
    %18 = vector.broadcast %17 : vector<1x37xf32> to vector<16x37xf32>
    %19 = arith.addf %16, %18 : vector<16x37xf32>
    %c0_16 = arith.constant 0 : index
    %c0_17 = arith.constant 0 : index
    %20 = vector.load %arg3[%c0_16, %c0_17] : memref<16x24xf32, #tpu.memory_space<vmem>>, vector<16x24xf32>
    %21 = arith.truncf %20 : vector<16x24xf32> to vector<16x24xbf16>
    %c0_18 = arith.constant 0 : index
    %c0_19 = arith.constant 0 : index
    %22 = vector.load %arg9[%c0_18, %c0_19] : memref<24x64xbf16, #tpu.memory_space<vmem>>, vector<24x64xbf16>
    %cst_20 = arith.constant dense<0.000000e+00> : vector<16x64xf32>
    %23 = tpu.matmul %21, %22, %cst_20 {dimension_numbers = #tpu.dot_dimension_numbers<[1], [0], [0], [1], [0, 0, 1, 1], [], []>} : vector<16x24xbf16>, vector<24x64xbf16>, vector<16x64xf32> -> vector<16x64xf32>
    %24 = arith.truncf %19 : vector<16x37xf32> to vector<16x37xbf16>
    %c0_21 = arith.constant 0 : index
    %c0_22 = arith.constant 0 : index
    %25 = vector.load %arg10[%c0_21, %c0_22] : memref<37x64xbf16, #tpu.memory_space<vmem>>, vector<37x64xbf16>
    %cst_23 = arith.constant dense<0.000000e+00> : vector<16x64xf32>
    %26 = tpu.matmul %24, %25, %cst_23 {dimension_numbers = #tpu.dot_dimension_numbers<[1], [0], [0], [1], [0, 0, 1, 1], [], []>} : vector<16x37xbf16>, vector<37x64xbf16>, vector<16x64xf32> -> vector<16x64xf32>
    %27 = arith.addf %23, %26 : vector<16x64xf32>
    %c0_24 = arith.constant 0 : index
    %c0_25 = arith.constant 0 : index
    %28 = vector.load %arg11[%c0_24, %c0_25] : memref<1x64xf32, #tpu.memory_space<vmem>>, vector<1x64xf32>
    %29 = vector.broadcast %28 : vector<1x64xf32> to vector<16x64xf32>
    %30 = arith.addf %27, %29 : vector<16x64xf32>
    %cst_26 = arith.constant 0.000000e+00 : f32
    %31 = vector.broadcast %cst_26 : f32 to vector<16x64xf32>
    %32 = arith.maximumf %30, %31 : vector<16x64xf32>
    %33 = arith.truncf %32 : vector<16x64xf32> to vector<16x64xbf16>
    %c0_27 = arith.constant 0 : index
    %c0_28 = arith.constant 0 : index
    %34 = vector.load %arg12[%c0_27, %c0_28] : memref<64x64xbf16, #tpu.memory_space<vmem>>, vector<64x64xbf16>
    %cst_29 = arith.constant dense<0.000000e+00> : vector<16x64xf32>
    %35 = tpu.matmul %33, %34, %cst_29 {dimension_numbers = #tpu.dot_dimension_numbers<[1], [0], [0], [1], [0, 0, 1, 1], [], []>} : vector<16x64xbf16>, vector<64x64xbf16>, vector<16x64xf32> -> vector<16x64xf32>
    %c0_30 = arith.constant 0 : index
    %c0_31 = arith.constant 0 : index
    %36 = vector.load %arg13[%c0_30, %c0_31] : memref<1x64xf32, #tpu.memory_space<vmem>>, vector<1x64xf32>
    %37 = vector.broadcast %36 : vector<1x64xf32> to vector<16x64xf32>
    %38 = arith.addf %35, %37 : vector<16x64xf32>
    %cst_32 = arith.constant 0.000000e+00 : f32
    %39 = vector.broadcast %cst_32 : f32 to vector<16x64xf32>
    %40 = arith.maximumf %38, %39 : vector<16x64xf32>
    %41 = arith.truncf %40 : vector<16x64xf32> to vector<16x64xbf16>
    %c0_33 = arith.constant 0 : index
    %c0_34 = arith.constant 0 : index
    %42 = vector.load %arg14[%c0_33, %c0_34] : memref<64x64xbf16, #tpu.memory_space<vmem>>, vector<64x64xbf16>
    %cst_35 = arith.constant dense<0.000000e+00> : vector<16x64xf32>
    %43 = tpu.matmul %41, %42, %cst_35 {dimension_numbers = #tpu.dot_dimension_numbers<[1], [0], [0], [1], [0, 0, 1, 1], [], []>} : vector<16x64xbf16>, vector<64x64xbf16>, vector<16x64xf32> -> vector<16x64xf32>
    %c0_36 = arith.constant 0 : index
    %c0_37 = arith.constant 0 : index
    %44 = vector.load %arg15[%c0_36, %c0_37] : memref<1x64xf32, #tpu.memory_space<vmem>>, vector<1x64xf32>
    %45 = vector.broadcast %44 : vector<1x64xf32> to vector<16x64xf32>
    %46 = arith.addf %43, %45 : vector<16x64xf32>
    %cst_38 = arith.constant 0.000000e+00 : f32
    %47 = vector.broadcast %cst_38 : f32 to vector<16x64xf32>
    %48 = arith.maximumf %46, %47 : vector<16x64xf32>
    %c0_39 = arith.constant 0 : index
    %c0_40 = arith.constant 0 : index
    %49 = vector.load %arg16[%c0_39, %c0_40] : memref<1x64xbf16, #tpu.memory_space<vmem>>, vector<1x64xbf16>
    %50 = arith.truncf %48 : vector<16x64xf32> to vector<16x64xbf16>
    %cst_41 = arith.constant dense<0.000000e+00> : vector<1x16xf32>
    %51 = tpu.matmul %49, %50, %cst_41 {dimension_numbers = #tpu.dot_dimension_numbers<[1], [1], [0], [0], [0, 0, 1, 0], [], []>} : vector<1x64xbf16>, vector<16x64xbf16>, vector<1x16xf32> -> vector<1x16xf32>
    %c0_42 = arith.constant 0 : index
    %c0_43 = arith.constant 0 : index
    %52 = vector.load %arg17[%c0_42, %c0_43] : memref<1x1xf32, #tpu.memory_space<vmem>>, vector<1x1xf32>
    %53 = vector.broadcast %52 : vector<1x1xf32> to vector<1x16xf32>
    %54 = arith.addf %51, %53 : vector<1x16xf32>
    %55 = vector.shape_cast %54 : vector<1x16xf32> to vector<1x1x16xf32>
    %c0_44 = arith.constant 0 : index
    %c0_45 = arith.constant 0 : index
    %c0_46 = arith.constant 0 : index
    %56 = vector.load %arg18[%c0_44, %c0_45, %c0_46] : memref<1x1x16xf32, #tpu.memory_space<vmem>>, vector<1x1x16xf32>
    tpu.vector_store %arg18[%c0_44, %c0_45, %c0_46], %55 {strides = array<i32>} : memref<1x1x16xf32, #tpu.memory_space<vmem>>, vector<1x1x16xf32>,
    return
  }
  func.func @transform_0(%arg0: i32) -> (i32, i32) {
    %c0_i32 = arith.constant 0 : i32
    %c0_i32_0 = arith.constant 0 : i32
    return %arg0, %c0_i32 : i32, i32
  }
  func.func @transform_1(%arg0: i32) -> (i32, i32) {
    %c0_i32 = arith.constant 0 : i32
    %c0_i32_0 = arith.constant 0 : i32
    return %arg0, %c0_i32 : i32, i32
  }
  func.func @transform_2(%arg0: i32) -> (i32, i32) {
    %c0_i32 = arith.constant 0 : i32
    %c0_i32_0 = arith.constant 0 : i32
    return %arg0, %c0_i32 : i32, i32
  }
  func.func @transform_3(%arg0: i32) -> (i32, i32) {
    %c0_i32 = arith.constant 0 : i32
    %c0_i32_0 = arith.constant 0 : i32
    %c0_i32_1 = arith.constant 0 : i32
    return %c0_i32, %c0_i32_0 : i32, i32
  }
  func.func @transform_4(%arg0: i32) -> (i32, i32) {
    %c0_i32 = arith.constant 0 : i32
    %c0_i32_0 = arith.constant 0 : i32
    %c0_i32_1 = arith.constant 0 : i32
    return %c0_i32, %c0_i32_0 : i32, i32
  }
  func.func @transform_5(%arg0: i32) -> (i32, i32) {
    %c0_i32 = arith.constant 0 : i32
    %c0_i32_0 = arith.constant 0 : i32
    %c0_i32_1 = arith.constant 0 : i32
    return %c0_i32, %c0_i32_0 : i32, i32
  }
  func.func @transform_6(%arg0: i32) -> (i32, i32) {
    %c0_i32 = arith.constant 0 : i32
    %c0_i32_0 = arith.constant 0 : i32
    %c0_i32_1 = arith.constant 0 : i32
    return %c0_i32, %c0_i32_0 : i32, i32
  }
  func.func @transform_7(%arg0: i32) -> (i32, i32) {
    %c0_i32 = arith.constant 0 : i32
    %c0_i32_0 = arith.constant 0 : i32
    %c0_i32_1 = arith.constant 0 : i32
    return %c0_i32, %c0_i32_0 : i32, i32
  }
  func.func @transform_8(%arg0: i32) -> (i32, i32) {
    %c0_i32 = arith.constant 0 : i32
    %c0_i32_0 = arith.constant 0 : i32
    %c0_i32_1 = arith.constant 0 : i32
    return %c0_i32, %c0_i32_0 : i32, i32
  }
  func.func @transform_9(%arg0: i32) -> (i32, i32) {
    %c0_i32 = arith.constant 0 : i32
    %c0_i32_0 = arith.constant 0 : i32
    %c0_i32_1 = arith.constant 0 : i32
    return %c0_i32, %c0_i32_0 : i32, i32
  }
  func.func @transform_10(%arg0: i32) -> (i32, i32) {
    %c0_i32 = arith.constant 0 : i32
    %c0_i32_0 = arith.constant 0 : i32
    %c0_i32_1 = arith.constant 0 : i32
    return %c0_i32, %c0_i32_0 : i32, i32
  }
  func.func @transform_11(%arg0: i32) -> (i32, i32) {
    %c0_i32 = arith.constant 0 : i32
    %c0_i32_0 = arith.constant 0 : i32
    %c0_i32_1 = arith.constant 0 : i32
    return %c0_i32, %c0_i32_0 : i32, i32
  }
  func.func @transform_12(%arg0: i32) -> (i32, i32) {
    %c0_i32 = arith.constant 0 : i32
    %c0_i32_0 = arith.constant 0 : i32
    %c0_i32_1 = arith.constant 0 : i32
    return %c0_i32, %c0_i32_0 : i32, i32
  }
  func.func @transform_13(%arg0: i32) -> (i32, i32) {
    %c0_i32 = arith.constant 0 : i32
    %c0_i32_0 = arith.constant 0 : i32
    %c0_i32_1 = arith.constant 0 : i32
    return %c0_i32, %c0_i32_0 : i32, i32
  }
  func.func @transform_14(%arg0: i32) -> (i32, i32) {
    %c0_i32 = arith.constant 0 : i32
    %c0_i32_0 = arith.constant 0 : i32
    %c0_i32_1 = arith.constant 0 : i32
    return %c0_i32, %c0_i32_0 : i32, i32
  }
  func.func @transform_15(%arg0: i32) -> (i32, i32) {
    %c0_i32 = arith.constant 0 : i32
    %c0_i32_0 = arith.constant 0 : i32
    %c0_i32_1 = arith.constant 0 : i32
    return %c0_i32, %c0_i32_0 : i32, i32
  }
  func.func @transform_16(%arg0: i32) -> (i32, i32) {
    %c0_i32 = arith.constant 0 : i32
    %c0_i32_0 = arith.constant 0 : i32
    %c0_i32_1 = arith.constant 0 : i32
    return %c0_i32, %c0_i32_0 : i32, i32
  }
  func.func @transform_17(%arg0: i32) -> (i32, i32, i32) {
    %c0_i32 = arith.constant 0 : i32
    %c0_i32_0 = arith.constant 0 : i32
    %c0_i32_1 = arith.constant 0 : i32
    return %arg0, %c0_i32, %c0_i32_0 : i32, i32, i32
  }
}

</mosaic_0001>

<llo_original>
// kernel: tpu_custom_call.1
$region0: #{tpu_custom_call.1}
  #allocation0 [shape = 'u32[]', space=smem, size = 0x4, offset = 0x4, fixed_abs, tag = 'smem constant byte address 0x4 - core index']
  #allocation1 [shape = 'u32[144,128]{1,0:T(1,128)}', space=vmem, size = 0x12000, scoped, tag = 'internal scratch']
  #allocation2 [shape = 'f32[1,1]{1,0:T(1,128)S(1)}', space=vmem, size = 0x200, scoped, tag = 'scoped memory for tpu_custom_call.1']
  %s0 = inlined_call_operand.hbm [shape: f32[16,96], index: 0, kind: input, shape index: {}]
  %s1 = inlined_call_operand.hbm [shape: f32[16,15], index: 1, kind: input, shape index: {}]
  %s2 = inlined_call_operand.hbm [shape: f32[16,24], index: 2, kind: input, shape index: {}]
  %s3 = inlined_call_operand.vmem [shape: bf16[96,111], index: 3, kind: input, shape index: {}]
  %s4 = inlined_call_operand.hbm [shape: bf16[15,111], index: 4, kind: input, shape index: {}]
  %s5 = inlined_call_operand.hbm [shape: f32[1,111], index: 5, kind: input, shape index: {}]
  %s6 = inlined_call_operand.vmem [shape: bf16[111,37], index: 6, kind: input, shape index: {}]
  %s7 = inlined_call_operand.hbm [shape: f32[1,37], index: 7, kind: input, shape index: {}]
  %s8 = inlined_call_operand.vmem [shape: bf16[24,64], index: 8, kind: input, shape index: {}]
  %s9 = inlined_call_operand.hbm [shape: bf16[37,64], index: 9, kind: input, shape index: {}]
  %s10 = inlined_call_operand.vmem [shape: f32[1,64], index: 10, kind: input, shape index: {}]
  %s11 = inlined_call_operand.vmem [shape: bf16[64,64], index: 11, kind: input, shape index: {}]
  %s12 = inlined_call_operand.vmem [shape: f32[1,64], index: 12, kind: input, shape index: {}]
  %s13 = inlined_call_operand.hbm [shape: bf16[64,64], index: 13, kind: input, shape index: {}]
  %s14 = inlined_call_operand.vmem [shape: f32[1,64], index: 14, kind: input, shape index: {}]
  %s15 = inlined_call_operand.vmem [shape: bf16[1,64], index: 15, kind: input, shape index: {}]
  %s16 = inlined_call_operand.<no memory space> [shape: f32[1,1], index: 16, kind: input, shape index: {}]
  %s17 = inlined_call_operand.hbm [shape: f32[1,1,16], index: 17, kind: output, shape index: {}]
  %s18 = sld [smem:[#allocation0]]
  $region110: #{tpu_custom_call.1} parent=0
    _
  %s20 = ssub.s32 1, %s18
  %s21 = scalar_select 0, %s20, %s18
  %v22 = vstv %s16
  %23 = vst [vmem:[#allocation2] sm:$0x1] %v22
  $region1: #{tpu_custom_call.1} parent=0
    #allocation3 [shape = 'u8[8192]{0}', space=vmem, size = 0x2000, scoped, tag = 'input window, operand 0, single buffered']
    #allocation4 [shape = 's32[1]{0}', space=sflag, size = 0x4, scoped, tag = 'scoped memory for tpu_custom_call.1']
    #allocation5 [shape = 's32[1]{0}', space=sflag, size = 0x4, scoped, tag = 'scoped memory for tpu_custom_call.1']
    #allocation6 [shape = 'u8[8192]{0}', space=vmem, size = 0x2000, scoped, tag = 'input window, operand 1, single buffered']
    #allocation7 [shape = 's32[1]{0}', space=sflag, size = 0x4, scoped, tag = 'scoped memory for tpu_custom_call.1']
    #allocation8 [shape = 'u8[8192]{0}', space=vmem, size = 0x2000, scoped, tag = 'input window, operand 2, single buffered']
    #allocation9 [shape = 'u8[4096]{0}', space=vmem, size = 0x1000, scoped, tag = 'input window, operand 4, single buffered']
    #allocation10 [shape = 's32[1]{0}', space=sflag, size = 0x4, scoped, tag = 'scoped memory for tpu_custom_call.1']
    #allocation11 [shape = 'u8[512]{0}', space=vmem, size = 0x400, scoped, tag = 'input window, operand 5, single buffered']
    #allocation12 [shape = 'u8[512]{0}', space=vmem, size = 0x400, scoped, tag = 'input window, operand 7, single buffered']
    #allocation13 [shape = 's32[1]{0}', space=sflag, size = 0x4, scoped, tag = 'scoped memory for tpu_custom_call.1']
    #allocation14 [shape = 'u8[10240]{0}', space=vmem, size = 0x2800, scoped, tag = 'input window, operand 9, single buffered']
    #allocation15 [shape = 'u8[16384]{0}', space=vmem, size = 0x4000, scoped, tag = 'input window, operand 13, single buffered']
    #allocation16 [shape = 's32[1]{0}', space=sflag, size = 0x4, scoped, tag = 'scoped memory for tpu_custom_call.1']
    #allocation17 [shape = 'u8[512]{0}', space=vmem, size = 0x400, scoped, tag = 'output window, operand 0, single buffered']
    %24 = vsyncpa [#allocation4], 0
    %25 = vsyncpa [#allocation7], 0
    %26 = vsyncpa [#allocation10], 0
    %27 = vsyncpa [#allocation13], 0
    %28 = vsyncpa [#allocation16], 0
    %29 = vsyncpa [#allocation5], 0
    // Predicated region
    $region2: #{tpu_custom_call.1} parent=1 // pred_check
      _
    $region3: #{tpu_custom_call.1} parent=1 // pred_check_branch
      %31 = sbr.rel (0) target = $region5
    $region4: #{tpu_custom_call.1} parent=1 // pred_region
      %s33 = ssub.s32 256, 256
      %34 = vsyncadd [#allocation4], %s33
      %s35 = sshll.u32 [#allocation3], 4
      %s36 = int_to_ptr.vmem [resolvable:$true] %s35
      %41 = dma.hbm_to_vmem [thread:$0]  %s0, 256, %s36, [#allocation4], 128, 128, 8
    $region5: #{tpu_custom_call.1} parent=1 // pred_fallthru
      _
    // Predicated region
    $region6: #{tpu_custom_call.1} parent=1 // pred_check
      _
    $region7: #{tpu_custom_call.1} parent=1 // pred_check_branch
      %43 = sbr.rel (0) target = $region9
    $region8: #{tpu_custom_call.1} parent=1 // pred_region
      %s45 = ssub.s32 256, 256
      %46 = vsyncadd [#allocation7], %s45
      %s47 = sshll.u32 [#allocation6], 4
      %s48 = int_to_ptr.vmem [resolvable:$true] %s47
      %53 = dma.hbm_to_vmem [thread:$0]  %s1, 256, %s48, [#allocation7], 128, 128, 8
    $region9: #{tpu_custom_call.1} parent=1 // pred_fallthru
      _
    // Predicated region
    $region10: #{tpu_custom_call.1} parent=1 // pred_check
      _
    $region11: #{tpu_custom_call.1} parent=1 // pred_check_branch
      %55 = sbr.rel (0) target = $region13
    $region12: #{tpu_custom_call.1} parent=1 // pred_region
      %s57 = ssub.s32 256, 256
      %58 = vsyncadd [#allocation7], %s57
      %s59 = sshll.u32 [#allocation8], 4
      %s60 = int_to_ptr.vmem [resolvable:$true] %s59
      %65 = dma.hbm_to_vmem [thread:$0]  %s2, 256, %s60, [#allocation7], 128, 128, 8
    $region13: #{tpu_custom_call.1} parent=1 // pred_fallthru
      _
    // Predicated region
    $region14: #{tpu_custom_call.1} parent=1 // pred_check
      _
    $region15: #{tpu_custom_call.1} parent=1 // pred_check_branch
      %67 = sbr.rel (0) target = $region17
    $region16: #{tpu_custom_call.1} parent=1 // pred_region
      _
    $region17: #{tpu_custom_call.1} parent=1 // pred_fallthru
      _
    // Predicated region
    $region18: #{tpu_custom_call.1} parent=1 // pred_check
      _
    $region19: #{tpu_custom_call.1} parent=1 // pred_check_branch
      %69 = sbr.rel (0) target = $region21
    $region20: #{tpu_custom_call.1} parent=1 // pred_region
      %s71 = ssub.s32 128, 128
      %72 = vsyncadd [#allocation10], %s71
      %s73 = sshll.u32 [#allocation9], 4
      %s74 = int_to_ptr.vmem [resolvable:$true] %s73
      %79 = dma.hbm_to_vmem [thread:$0]  %s4, 128, %s74, [#allocation10], 64, 64, 4
    $region21: #{tpu_custom_call.1} parent=1 // pred_fallthru
      _
    // Predicated region
    $region22: #{tpu_custom_call.1} parent=1 // pred_check
      _
    $region23: #{tpu_custom_call.1} parent=1 // pred_check_branch
      %81 = sbr.rel (0) target = $region25
    $region24: #{tpu_custom_call.1} parent=1 // pred_region
      %s83 = ssub.s32 16, 16
      %84 = vsyncadd [#allocation10], %s83
      %s86 = sshll.u32 [#allocation11], 4
      %s87 = int_to_ptr.vmem [resolvable:$true] %s86
      %89 = dma.hbm_to_vmem [thread:$0]  %s5, 16, %s87, [#allocation10]
    $region25: #{tpu_custom_call.1} parent=1 // pred_fallthru
      _
    // Predicated region
    $region26: #{tpu_custom_call.1} parent=1 // pred_check
      _
    $region27: #{tpu_custom_call.1} parent=1 // pred_check_branch
      %91 = sbr.rel (0) target = $region29
    $region28: #{tpu_custom_call.1} parent=1 // pred_region
      _
    $region29: #{tpu_custom_call.1} parent=1 // pred_fallthru
      _
    // Predicated region
    $region30: #{tpu_custom_call.1} parent=1 // pred_check
      _
    $region31: #{tpu_custom_call.1} parent=1 // pred_check_branch
      %93 = sbr.rel (0) target = $region33
    $region32: #{tpu_custom_call.1} parent=1 // pred_region
      %s95 = ssub.s32 16, 16
      %96 = vsyncadd [#allocation13], %s95
      %s98 = sshll.u32 [#allocation12], 4
      %s99 = int_to_ptr.vmem [resolvable:$true] %s98
      %101 = dma.hbm_to_vmem [thread:$0]  %s7, 16, %s99, [#allocation13]
    $region33: #{tpu_custom_call.1} parent=1 // pred_fallthru
      _
    // Predicated region
    $region34: #{tpu_custom_call.1} parent=1 // pred_check
      _
    $region35: #{tpu_custom_call.1} parent=1 // pred_check_branch
      %103 = sbr.rel (0) target = $region37
    $region36: #{tpu_custom_call.1} parent=1 // pred_region
      _
    $region37: #{tpu_custom_call.1} parent=1 // pred_fallthru
      _
    // Predicated region
    $region38: #{tpu_custom_call.1} parent=1 // pred_check
      _
    $region39: #{tpu_custom_call.1} parent=1 // pred_check_branch
      %105 = sbr.rel (0) target = $region41
    $region40: #{tpu_custom_call.1} parent=1 // pred_region
      %s107 = ssub.s32 320, 320
      %108 = vsyncadd [#allocation13], %s107
      %s109 = sshll.u32 [#allocation14], 4
      %s110 = int_to_ptr.vmem [resolvable:$true] %s109
      %115 = dma.hbm_to_vmem [thread:$0]  %s9, 320, %s110, [#allocation13], 64, 64, 4
    $region41: #{tpu_custom_call.1} parent=1 // pred_fallthru
      _
    // Predicated region
    $region42: #{tpu_custom_call.1} parent=1 // pred_check
      _
    $region43: #{tpu_custom_call.1} parent=1 // pred_check_branch
      %117 = sbr.rel (0) target = $region45
    $region44: #{tpu_custom_call.1} parent=1 // pred_region
      _
    $region45: #{tpu_custom_call.1} parent=1 // pred_fallthru
      _
    // Predicated region
    $region46: #{tpu_custom_call.1} parent=1 // pred_check
      _
    $region47: #{tpu_custom_call.1} parent=1 // pred_check_branch
      %119 = sbr.rel (0) target = $region49
    $region48: #{tpu_custom_call.1} parent=1 // pred_region
      _
    $region49: #{tpu_custom_call.1} parent=1 // pred_fallthru
      _
    // Predicated region
    $region50: #{tpu_custom_call.1} parent=1 // pred_check
      _
    $region51: #{tpu_custom_call.1} parent=1 // pred_check_branch
      %121 = sbr.rel (0) target = $region53
    $region52: #{tpu_custom_call.1} parent=1 // pred_region
      _
    $region53: #{tpu_custom_call.1} parent=1 // pred_fallthru
      _
    // Predicated region
    $region54: #{tpu_custom_call.1} parent=1 // pred_check
      _
    $region55: #{tpu_custom_call.1} parent=1 // pred_check_branch
      %123 = sbr.rel (0) target = $region57
    $region56: #{tpu_custom_call.1} parent=1 // pred_region
      %s125 = ssub.s32 512, 512
      %126 = vsyncadd [#allocation16], %s125
      %s127 = sshll.u32 [#allocation15], 4
      %s128 = int_to_ptr.vmem [resolvable:$true] %s127
      %133 = dma.hbm_to_vmem [thread:$0]  %s13, 512, %s128, [#allocation16], 64, 64, 4
    $region57: #{tpu_custom_call.1} parent=1 // pred_fallthru
      _
    // Predicated region
    $region58: #{tpu_custom_call.1} parent=1 // pred_check
      _
    $region59: #{tpu_custom_call.1} parent=1 // pred_check_branch
      %135 = sbr.rel (0) target = $region61
    $region60: #{tpu_custom_call.1} parent=1 // pred_region
      _
    $region61: #{tpu_custom_call.1} parent=1 // pred_fallthru
      _
    // Predicated region
    $region62: #{tpu_custom_call.1} parent=1 // pred_check
      _
    $region63: #{tpu_custom_call.1} parent=1 // pred_check_branch
      %137 = sbr.rel (0) target = $region65
    $region64: #{tpu_custom_call.1} parent=1 // pred_region
      _
    $region65: #{tpu_custom_call.1} parent=1 // pred_fallthru
      _
    // Predicated region
    $region66: #{tpu_custom_call.1} parent=1 // pred_check
      _
    $region67: #{tpu_custom_call.1} parent=1 // pred_check_branch
      %139 = sbr.rel (0) target = $region69
    $region68: #{tpu_custom_call.1} parent=1 // pred_region
      _
    $region69: #{tpu_custom_call.1} parent=1 // pred_fallthru
      _
    // Predicated region
    $region70: #{tpu_custom_call.1} parent=1 // pred_check
      _
    $region71: #{tpu_custom_call.1} parent=1 // pred_check_branch
      %141 = sbr.rel (0) target = $region73
    $region72: #{tpu_custom_call.1} parent=1 // pred_region
      %142 = dma.done [#allocation4], 256
    $region73: #{tpu_custom_call.1} parent=1 // pred_fallthru
      _
    // Predicated region
    $region74: #{tpu_custom_call.1} parent=1 // pred_check
      _
    $region75: #{tpu_custom_call.1} parent=1 // pred_check_branch
      %144 = sbr.rel (0) target = $region77
    $region76: #{tpu_custom_call.1} parent=1 // pred_region
      %145 = dma.done [#allocation7], 256
    $region77: #{tpu_custom_call.1} parent=1 // pred_fallthru
      _
    // Predicated region
    $region78: #{tpu_custom_call.1} parent=1 // pred_check
      _
    $region79: #{tpu_custom_call.1} parent=1 // pred_check_branch
      %147 = sbr.rel (0) target = $region81
    $region80: #{tpu_custom_call.1} parent=1 // pred_region
      %148 = dma.done [#allocation7], 256
    $region81: #{tpu_custom_call.1} parent=1 // pred_fallthru
      _
    // Predicated region
    $region82: #{tpu_custom_call.1} parent=1 // pred_check
      _
    $region83: #{tpu_custom_call.1} parent=1 // pred_check_branch
      %150 = sbr.rel (0) target = $region85
    $region84: #{tpu_custom_call.1} parent=1 // pred_region
      %151 = dma.done [#allocation10], 128
    $region85: #{tpu_custom_call.1} parent=1 // pred_fallthru
      _
    // Predicated region
    $region86: #{tpu_custom_call.1} parent=1 // pred_check
      _
    $region87: #{tpu_custom_call.1} parent=1 // pred_check_branch
      %153 = sbr.rel (0) target = $region89
    $region88: #{tpu_custom_call.1} parent=1 // pred_region
      %154 = dma.done [#allocation10], 16
    $region89: #{tpu_custom_call.1} parent=1 // pred_fallthru
      _
    // Predicated region
    $region90: #{tpu_custom_call.1} parent=1 // pred_check
      _
    $region91: #{tpu_custom_call.1} parent=1 // pred_check_branch
      %156 = sbr.rel (0) target = $region93
    $region92: #{tpu_custom_call.1} parent=1 // pred_region
      %157 = dma.done [#allocation13], 16
    $region93: #{tpu_custom_call.1} parent=1 // pred_fallthru
      _
    // Predicated region
    $region94: #{tpu_custom_call.1} parent=1 // pred_check
      _
    $region95: #{tpu_custom_call.1} parent=1 // pred_check_branch
      %159 = sbr.rel (0) target = $region97
    $region96: #{tpu_custom_call.1} parent=1 // pred_region
      %160 = dma.done [#allocation13], 320
    $region97: #{tpu_custom_call.1} parent=1 // pred_fallthru
      _
    // Predicated region
    $region98: #{tpu_custom_call.1} parent=1 // pred_check
      _
    $region99: #{tpu_custom_call.1} parent=1 // pred_check_branch
      %162 = sbr.rel (0) target = $region101
    $region100: #{tpu_custom_call.1} parent=1 // pred_region
      %163 = dma.done [#allocation16], 512
    $region101: #{tpu_custom_call.1} parent=1 // pred_fallthru
      _
    %v165 = vld [vmem:[#allocation3] sm:$0xff]
    %v166 = vld [vmem:[#allocation3 + $0x8] sm:$0xff]
    %v167 = vpack.c.bf16 %v166, %v165
    %v168 = vld [vmem:[%s3] sm:$0xf]
    %v169 = vld [vmem:[%s3 + $0x4] sm:$0xf]
    %v170 = vld [vmem:[%s3 + $0x8] sm:$0xf]
    %v171 = vld [vmem:[%s3 + $0xc] sm:$0xf]
    %v172 = vld [vmem:[%s3 + $0x10] sm:$0xf]
    %v173 = vld [vmem:[%s3 + $0x14] sm:$0xf]
    %v174 = vld [vmem:[%s3 + $0x18] sm:$0xf]
    %v175 = vld [vmem:[%s3 + $0x1c] sm:$0xf]
    %v176 = vld [vmem:[%s3 + $0x20] sm:$0xf]
    %v177 = vld [vmem:[%s3 + $0x24] sm:$0xf]
    %v178 = vld [vmem:[%s3 + $0x28] sm:$0xf]
    %v179 = vld [vmem:[%s3 + $0x2c] sm:$0xf]
    %v180 = vld [vmem:[#allocation6] sm:$0xff]
    %v181 = vld [vmem:[#allocation6 + $0x8] sm:$0xff]
    %v182 = vpack.c.bf16 %v181, %v180
    %v183 = vld [vmem:[#allocation9] sm:$0xf]
    %v184 = vld [vmem:[#allocation9 + $0x4] sm:$0xf]
    %v187 = vunpack.c.l.b16 %v183
    %v188 = vunpack.c.l.b16 %v184
    %v189 = vpack.c.b16 %v188, %v187
    %vm190 = vcmask 121856
    %v192 = vsel %vm190, %v182, 0
    %vm194 = vcmask 1046528
    %vm195 = vcmask 1047552
    %v196 = vsel %vm194, 4294967295, 65535
    %v197 = vsel %vm195, %v196, 0
    %v199 = vand.u32 %v189, %v197
    %201 = vmatprep.subr.bf16.mxu0 0
    %202 = vmatpush1.bf16.msra.mxu0 0
    %203 = vmatprep.subr.bf16.mxu0 0
    %204 = vmatpush1.bf16.msra.mxu0 0
    %205 = vmatprep.subr.bf16.mxu0 0
    %206 = vmatpush1.bf16.msra.mxu0 0
    %207 = vmatprep.subr.bf16.mxu0 0
    %208 = vmatpush1.bf16.msra.mxu0 0
    %209 = vmatprep.subr.bf16.mxu0 0
    %210 = vmatpush1.bf16.msra.mxu0 0
    %211 = vmatprep.subr.bf16.mxu0 0
    %212 = vmatpush1.bf16.msra.mxu0 0
    %213 = vmatprep.subr.bf16.mxu0 0
    %214 = vmatpush1.bf16.msra.mxu0 0
    %215 = vmatprep.subr.bf16.mxu0 0
    %216 = vmatpush1.bf16.msra.mxu0 %v199
    %217 = vmatprep.subr.bf16.mxu0 0
    %218 = vmatpush2.bf16.msra.mxu0 0
    %219 = vmatprep.subr.bf16.mxu0 0
    %220 = vmatpush2.bf16.msra.mxu0 0
    %221 = vmatprep.subr.bf16.mxu0 0
    %222 = vmatpush2.bf16.msra.mxu0 0
    %223 = vmatprep.subr.bf16.mxu0 0
    %224 = vmatpush2.bf16.msra.mxu0 0
    %225 = vmatprep.subr.bf16.mxu0 0
    %226 = vmatpush2.bf16.msra.mxu0 0
    %227 = vmatprep.subr.bf16.mxu0 0
    %228 = vmatpush2.bf16.msra.mxu0 0
    %229 = vmatprep.subr.bf16.mxu0 0
    %230 = vmatpush2.bf16.msra.mxu0 0
    %231 = vmatprep.subr.bf16.mxu0 0
    %232 = vmatpush2.bf16.msra.mxu0 0
    %233 = vmatprep.mubr.bf16.mxu0 0
    %234 = vmatmul.mubr.bf16.gmra.mxu0 %v192
    %v235 = vpop.f32.mrf.mxu0
    %v236 = vadd.f32 0.0, %v235
    %v237 = vpop.f32.mrf.mxu0
    %v238 = vpop.f32.mrf.mxu0
    %v239 = vadd.f32 0.0, %v238
    %v240 = vpop.f32.mrf.mxu0
    %241 = vdwg.mxu0
    %v254 = vunpack.c.l.b16 %v168
    %v255 = vunpack.c.l.b16 %v169
    %v256 = vunpack.c.l.b16 %v170
    %v257 = vunpack.c.l.b16 %v171
    %v258 = vunpack.c.l.b16 %v172
    %v259 = vunpack.c.l.b16 %v173
    %v260 = vunpack.c.l.b16 %v174
    %v261 = vunpack.c.l.b16 %v175
    %v262 = vunpack.c.l.b16 %v176
    %v263 = vunpack.c.l.b16 %v177
    %v264 = vunpack.c.l.b16 %v178
    %v265 = vunpack.c.l.b16 %v179
    %v266 = vpack.c.b16 %v255, %v254
    %v267 = vpack.c.b16 %v257, %v256
    %v268 = vpack.c.b16 %v259, %v258
    %v269 = vpack.c.b16 %v261, %v260
    %v270 = vpack.c.b16 %v263, %v262
    %v271 = vpack.c.b16 %v265, %v264
    %vm278 = vcmask 785408
    %v280 = vsel %vm278, %v167, 0
    %282 = vmatprep.subr.bf16.mxu0 0
    %283 = vmatpush1.bf16.msra.mxu0 0
    %284 = vmatprep.subr.bf16.mxu0 0
    %285 = vmatpush1.bf16.msra.mxu0 0
    %286 = vmatprep.subr.bf16.mxu0 0
    %287 = vmatpush1.bf16.msra.mxu0 %v271
    %288 = vmatprep.subr.bf16.mxu0 0
    %289 = vmatpush1.bf16.msra.mxu0 %v270
    %290 = vmatprep.subr.bf16.mxu0 0
    %291 = vmatpush1.bf16.msra.mxu0 %v269
    %292 = vmatprep.subr.bf16.mxu0 0
    %293 = vmatpush1.bf16.msra.mxu0 %v268
    %294 = vmatprep.subr.bf16.mxu0 0
    %295 = vmatpush1.bf16.msra.mxu0 %v267
    %296 = vmatprep.subr.bf16.mxu0 0
    %297 = vmatpush1.bf16.msra.mxu0 %v266
    %298 = vmatprep.subr.bf16.mxu0 0
    %299 = vmatpush2.bf16.msra.mxu0 0
    %300 = vmatprep.subr.bf16.mxu0 0
    %301 = vmatpush2.bf16.msra.mxu0 0
    %302 = vmatprep.subr.bf16.mxu0 0
    %303 = vmatpush2.bf16.msra.mxu0 0
    %304 = vmatprep.subr.bf16.mxu0 0
    %305 = vmatpush2.bf16.msra.mxu0 0
    %306 = vmatprep.subr.bf16.mxu0 0
    %307 = vmatpush2.bf16.msra.mxu0 0
    %308 = vmatprep.subr.bf16.mxu0 0
    %309 = vmatpush2.bf16.msra.mxu0 0
    %310 = vmatprep.subr.bf16.mxu0 0
    %311 = vmatpush2.bf16.msra.mxu0 0
    %312 = vmatprep.subr.bf16.mxu0 0
    %313 = vmatpush2.bf16.msra.mxu0 0
    %314 = vmatprep.mubr.bf16.mxu0 0
    %315 = vmatmul.mubr.bf16.gmra.mxu0 %v280
    %v316 = vpop.f32.mrf.mxu0
    %v317 = vadd.f32 %v236, %v316
    %v318 = vpop.f32.mrf.mxu0
    %v319 = vpop.f32.mrf.mxu0
    %v320 = vadd.f32 %v239, %v319
    %v321 = vpop.f32.mrf.mxu0
    %322 = vdwg.mxu0
    %v323 = vld [vmem:[#allocation11] sm:$0x1]
    %v325 = vlaneseq
    %v326 = vshrl.u32 %v325, 7
    %v327 = vsub.s32 0, %v326
    %v328 = vrot.slane %v323, %v327
    %v330 = vadd.f32 %v317, %v328
    %v331 = vadd.f32 %v320, %v328
    %v332 = vmax.f32 %v330, 0.0
    %v333 = vmax.f32 %v331, 0.0
    %v334 = vpack.c.bf16 %v333, %v332
    %v335 = vld [vmem:[%s6] sm:$0xf]
    %v336 = vld [vmem:[%s6 + $0x4] sm:$0xf]
    %v337 = vld [vmem:[%s6 + $0x8] sm:$0xf]
    %v338 = vld [vmem:[%s6 + $0xc] sm:$0xf]
    %v339 = vld [vmem:[%s6 + $0x10] sm:$0xf]
    %v340 = vld [vmem:[%s6 + $0x14] sm:$0xf]
    %v341 = vld [vmem:[%s6 + $0x18] sm:$0xf]
    %v342 = vld [vmem:[%s6 + $0x1c] sm:$0xf]
    %v343 = vld [vmem:[%s6 + $0x20] sm:$0xf]
    %v344 = vld [vmem:[%s6 + $0x24] sm:$0xf]
    %v345 = vld [vmem:[%s6 + $0x28] sm:$0xf]
    %v346 = vld [vmem:[%s6 + $0x2c] sm:$0xf]
    %v347 = vld [vmem:[%s6 + $0x30] sm:$0xf]
    %v348 = vld [vmem:[%s6 + $0x34] sm:$0xf]
    %v349 = vld [vmem:[#allocation12] sm:$0x1]
    %v351 = vlaneseq
    %v352 = vshrl.u32 %v351, 7
    %v353 = vsub.s32 0, %v352
    %v354 = vrot.slane %v349, %v353
    %v370 = vunpack.c.l.b16 %v335
    %v371 = vunpack.c.l.b16 %v336
    %v372 = vunpack.c.l.b16 %v337
    %v373 = vunpack.c.l.b16 %v338
    %v374 = vunpack.c.l.b16 %v339
    %v375 = vunpack.c.l.b16 %v340
    %v376 = vunpack.c.l.b16 %v341
    %v377 = vunpack.c.l.b16 %v342
    %v378 = vunpack.c.l.b16 %v343
    %v379 = vunpack.c.l.b16 %v344
    %v380 = vunpack.c.l.b16 %v345
    %v381 = vunpack.c.l.b16 %v346
    %v382 = vunpack.c.l.b16 %v347
    %v383 = vunpack.c.l.b16 %v348
    %v384 = vpack.c.b16 %v371, %v370
    %v385 = vpack.c.b16 %v373, %v372
    %v386 = vpack.c.b16 %v375, %v374
    %v387 = vpack.c.b16 %v377, %v376
    %v388 = vpack.c.b16 %v379, %v378
    %v389 = vpack.c.b16 %v381, %v380
    %v390 = vpack.c.b16 %v383, %v382
    %vm397 = vcmask 908288
    %v399 = vsel %vm397, %v334, 0
    %v402 = vand.u32 %v390, %v197
    %404 = vmatprep.subr.bf16.mxu0 0
    %405 = vmatpush1.bf16.msra.mxu0 0
    %406 = vmatprep.subr.bf16.mxu0 0
    %407 = vmatpush1.bf16.msra.mxu0 %v402
    %408 = vmatprep.subr.bf16.mxu0 0
    %409 = vmatpush1.bf16.msra.mxu0 %v389
    %410 = vmatprep.subr.bf16.mxu0 0
    %411 = vmatpush1.bf16.msra.mxu0 %v388
    %412 = vmatprep.subr.bf16.mxu0 0
    %413 = vmatpush1.bf16.msra.mxu0 %v387
    %414 = vmatprep.subr.bf16.mxu0 0
    %415 = vmatpush1.bf16.msra.mxu0 %v386
    %416 = vmatprep.subr.bf16.mxu0 0
    %417 = vmatpush1.bf16.msra.mxu0 %v385
    %418 = vmatprep.subr.bf16.mxu0 0
    %419 = vmatpush1.bf16.msra.mxu0 %v384
    %420 = vmatprep.subr.bf16.mxu0 0
    %421 = vmatpush2.bf16.msra.mxu0 0
    %422 = vmatprep.subr.bf16.mxu0 0
    %423 = vmatpush2.bf16.msra.mxu0 0
    %424 = vmatprep.subr.bf16.mxu0 0
    %425 = vmatpush2.bf16.msra.mxu0 0
    %426 = vmatprep.subr.bf16.mxu0 0
    %427 = vmatpush2.bf16.msra.mxu0 0
    %428 = vmatprep.subr.bf16.mxu0 0
    %429 = vmatpush2.bf16.msra.mxu0 0
    %430 = vmatprep.subr.bf16.mxu0 0
    %431 = vmatpush2.bf16.msra.mxu0 0
    %432 = vmatprep.subr.bf16.mxu0 0
    %433 = vmatpush2.bf16.msra.mxu0 0
    %434 = vmatprep.subr.bf16.mxu0 0
    %435 = vmatpush2.bf16.msra.mxu0 0
    %436 = vmatprep.mubr.bf16.mxu0 0
    %437 = vmatmul.mubr.bf16.gmra.mxu0 %v399
    %v438 = vpop.f32.mrf.mxu0
    %v439 = vadd.f32 %v354, %v438
    %v440 = vpop.f32.mrf.mxu0
    %v441 = vpop.f32.mrf.mxu0
    %v442 = vadd.f32 %v354, %v441
    %v443 = vpop.f32.mrf.mxu0
    %444 = vdwg.mxu0
    %v445 = vld [vmem:[#allocation8] sm:$0xff]
    %v446 = vld [vmem:[#allocation8 + $0x8] sm:$0xff]
    %v447 = vpack.c.bf16 %v446, %v445
    %v448 = vld [vmem:[%s8] sm:$0xf]
    %v449 = vld [vmem:[%s8 + $0x4] sm:$0xf]
    %v450 = vld [vmem:[%s8 + $0x8] sm:$0xf]
    %v451 = vpack.c.bf16 %v442, %v439
    %v452 = vld [vmem:[#allocation14] sm:$0xf]
    %v453 = vld [vmem:[#allocation14 + $0x4] sm:$0xf]
    %v454 = vld [vmem:[#allocation14 + $0x8] sm:$0xf]
    %v455 = vld [vmem:[#allocation14 + $0xc] sm:$0xf]
    %v456 = vld [vmem:[#allocation14 + $0x10] sm:$0x7]
    %v462 = vunpack.c.l.b16 %v452
    %v463 = vunpack.c.l.b16 %v453
    %v464 = vunpack.c.l.b16 %v454
    %v465 = vunpack.c.l.b16 %v455
    %v466 = vunpack.c.l.b16 %v456
    %v467 = vpack.c.b16 %v463, %v462
    %v468 = vpack.c.b16 %v465, %v464
    %v469 = vpack.c.b16 %v466, %v466
    %vm472 = vcmask 302080
    %v474 = vsel %vm472, %v451, 0
    %vm476 = vcmask 1041408
    %vm477 = vcmask 1042432
    %v478 = vsel %vm476, 4294967295, 65535
    %v479 = vsel %vm477, %v478, 0
    %v481 = vand.u32 %v469, %v479
    %483 = vmatprep.subr.bf16.mxu0 0
    %484 = vmatpush1.bf16.msra.mxu0 0
    %485 = vmatprep.subr.bf16.mxu0 0
    %486 = vmatpush1.bf16.msra.mxu0 0
    %487 = vmatprep.subr.bf16.mxu0 0
    %488 = vmatpush1.bf16.msra.mxu0 0
    %489 = vmatprep.subr.bf16.mxu0 0
    %490 = vmatpush1.bf16.msra.mxu0 0
    %491 = vmatprep.subr.bf16.mxu0 0
    %492 = vmatpush1.bf16.msra.mxu0 0
    %493 = vmatprep.subr.bf16.mxu0 0
    %494 = vmatpush1.bf16.msra.mxu0 %v481
    %495 = vmatprep.subr.bf16.mxu0 0
    %496 = vmatpush1.bf16.msra.mxu0 %v468
    %497 = vmatprep.subr.bf16.mxu0 0
    %498 = vmatpush1.bf16.msra.mxu0 %v467
    %499 = vmatprep.subr.bf16.mxu0 0
    %500 = vmatpush2.bf16.msra.mxu0 0
    %501 = vmatprep.subr.bf16.mxu0 0
    %502 = vmatpush2.bf16.msra.mxu0 0
    %503 = vmatprep.subr.bf16.mxu0 0
    %504 = vmatpush2.bf16.msra.mxu0 0
    %505 = vmatprep.subr.bf16.mxu0 0
    %506 = vmatpush2.bf16.msra.mxu0 0
    %507 = vmatprep.subr.bf16.mxu0 0
    %508 = vmatpush2.bf16.msra.mxu0 0
    %509 = vmatprep.subr.bf16.mxu0 0
    %510 = vmatpush2.bf16.msra.mxu0 0
    %511 = vmatprep.subr.bf16.mxu0 0
    %512 = vmatpush2.bf16.msra.mxu0 0
    %513 = vmatprep.subr.bf16.mxu0 0
    %514 = vmatpush2.bf16.msra.mxu0 0
    %515 = vmatprep.mubr.bf16.mxu0 0
    %516 = vmatmul.mubr.bf16.gmra.mxu0 %v474
    %v517 = vpop.f32.mrf.mxu0
    %v518 = vadd.f32 0.0, %v517
    %v519 = vpop.f32.mrf.mxu0
    %v520 = vpop.f32.mrf.mxu0
    %v521 = vadd.f32 0.0, %v520
    %v522 = vpop.f32.mrf.mxu0
    %523 = vdwg.mxu0
    %v527 = vunpack.c.l.b16 %v448
    %v528 = vunpack.c.l.b16 %v449
    %v529 = vunpack.c.l.b16 %v450
    %v530 = vpack.c.b16 %v528, %v527
    %v531 = vpack.c.b16 %v529, %v529
    %vm533 = vcmask 195584
    %v535 = vsel %vm533, %v447, 0
    %vm537 = vcmask 1043456
    %v539 = vsel %vm537, %v531, 0
    %541 = vmatprep.subr.bf16.mxu0 0
    %542 = vmatpush1.bf16.msra.mxu0 0
    %543 = vmatprep.subr.bf16.mxu0 0
    %544 = vmatpush1.bf16.msra.mxu0 0
    %545 = vmatprep.subr.bf16.mxu0 0
    %546 = vmatpush1.bf16.msra.mxu0 0
    %547 = vmatprep.subr.bf16.mxu0 0
    %548 = vmatpush1.bf16.msra.mxu0 0
    %549 = vmatprep.subr.bf16.mxu0 0
    %550 = vmatpush1.bf16.msra.mxu0 0
    %551 = vmatprep.subr.bf16.mxu0 0
    %552 = vmatpush1.bf16.msra.mxu0 0
    %553 = vmatprep.subr.bf16.mxu0 0
    %554 = vmatpush1.bf16.msra.mxu0 %v539
    %555 = vmatprep.subr.bf16.mxu0 0
    %556 = vmatpush1.bf16.msra.mxu0 %v530
    %557 = vmatprep.subr.bf16.mxu0 0
    %558 = vmatpush2.bf16.msra.mxu0 0
    %559 = vmatprep.subr.bf16.mxu0 0
    %560 = vmatpush2.bf16.msra.mxu0 0
    %561 = vmatprep.subr.bf16.mxu0 0
    %562 = vmatpush2.bf16.msra.mxu0 0
    %563 = vmatprep.subr.bf16.mxu0 0
    %564 = vmatpush2.bf16.msra.mxu0 0
    %565 = vmatprep.subr.bf16.mxu0 0
    %566 = vmatpush2.bf16.msra.mxu0 0
    %567 = vmatprep.subr.bf16.mxu0 0
    %568 = vmatpush2.bf16.msra.mxu0 0
    %569 = vmatprep.subr.bf16.mxu0 0
    %570 = vmatpush2.bf16.msra.mxu0 0
    %571 = vmatprep.subr.bf16.mxu0 0
    %572 = vmatpush2.bf16.msra.mxu0 0
    %573 = vmatprep.mubr.bf16.mxu0 0
    %574 = vmatmul.mubr.bf16.gmra.mxu0 %v535
    %v575 = vpop.f32.mrf.mxu0
    %v576 = vadd.f32 %v518, %v575
    %v577 = vpop.f32.mrf.mxu0
    %v578 = vpop.f32.mrf.mxu0
    %v579 = vadd.f32 %v521, %v578
    %v580 = vpop.f32.mrf.mxu0
    %581 = vdwg.mxu0
    %v582 = vld [vmem:[%s10] sm:$0x1]
    %v584 = vlaneseq
    %v585 = vshrl.u32 %v584, 7
    %v586 = vsub.s32 0, %v585
    %v587 = vrot.slane %v582, %v586
    %v589 = vadd.f32 %v576, %v587
    %v590 = vadd.f32 %v579, %v587
    %v591 = vmax.f32 %v589, 0.0
    %v592 = vmax.f32 %v590, 0.0
    %v593 = vpack.c.bf16 %v592, %v591
    %v594 = vld [vmem:[%s11] sm:$0xf]
    %v595 = vld [vmem:[%s11 + $0x4] sm:$0xf]
    %v596 = vld [vmem:[%s11 + $0x8] sm:$0xf]
    %v597 = vld [vmem:[%s11 + $0xc] sm:$0xf]
    %v598 = vld [vmem:[%s11 + $0x10] sm:$0xf]
    %v599 = vld [vmem:[%s11 + $0x14] sm:$0xf]
    %v600 = vld [vmem:[%s11 + $0x18] sm:$0xf]
    %v601 = vld [vmem:[%s11 + $0x1c] sm:$0xf]
    %v602 = vld [vmem:[%s12] sm:$0x1]
    %v604 = vlaneseq
    %v605 = vshrl.u32 %v604, 7
    %v606 = vsub.s32 0, %v605
    %v607 = vrot.slane %v602, %v606
    %v617 = vunpack.c.l.b16 %v594
    %v618 = vunpack.c.l.b16 %v595
    %v619 = vunpack.c.l.b16 %v596
    %v620 = vunpack.c.l.b16 %v597
    %v621 = vunpack.c.l.b16 %v598
    %v622 = vunpack.c.l.b16 %v599
    %v623 = vunpack.c.l.b16 %v600
    %v624 = vunpack.c.l.b16 %v601
    %v625 = vpack.c.b16 %v618, %v617
    %v626 = vpack.c.b16 %v620, %v619
    %v627 = vpack.c.b16 %v622, %v621
    %v628 = vpack.c.b16 %v624, %v623
    %vm633 = vcmask 523264
    %v635 = vsel %vm633, %v593, 0
    %637 = vmatprep.subr.bf16.mxu0 0
    %638 = vmatpush1.bf16.msra.mxu0 0
    %639 = vmatprep.subr.bf16.mxu0 0
    %640 = vmatpush1.bf16.msra.mxu0 0
    %641 = vmatprep.subr.bf16.mxu0 0
    %642 = vmatpush1.bf16.msra.mxu0 0
    %643 = vmatprep.subr.bf16.mxu0 0
    %644 = vmatpush1.bf16.msra.mxu0 0
    %645 = vmatprep.subr.bf16.mxu0 0
    %646 = vmatpush1.bf16.msra.mxu0 %v628
    %647 = vmatprep.subr.bf16.mxu0 0
    %648 = vmatpush1.bf16.msra.mxu0 %v627
    %649 = vmatprep.subr.bf16.mxu0 0
    %650 = vmatpush1.bf16.msra.mxu0 %v626
    %651 = vmatprep.subr.bf16.mxu0 0
    %652 = vmatpush1.bf16.msra.mxu0 %v625
    %653 = vmatprep.subr.bf16.mxu0 0
    %654 = vmatpush2.bf16.msra.mxu0 0
    %655 = vmatprep.subr.bf16.mxu0 0
    %656 = vmatpush2.bf16.msra.mxu0 0
    %657 = vmatprep.subr.bf16.mxu0 0
    %658 = vmatpush2.bf16.msra.mxu0 0
    %659 = vmatprep.subr.bf16.mxu0 0
    %660 = vmatpush2.bf16.msra.mxu0 0
    %661 = vmatprep.subr.bf16.mxu0 0
    %662 = vmatpush2.bf16.msra.mxu0 0
    %663 = vmatprep.subr.bf16.mxu0 0
    %664 = vmatpush2.bf16.msra.mxu0 0
    %665 = vmatprep.subr.bf16.mxu0 0
    %666 = vmatpush2.bf16.msra.mxu0 0
    %667 = vmatprep.subr.bf16.mxu0 0
    %668 = vmatpush2.bf16.msra.mxu0 0
    %669 = vmatprep.mubr.bf16.mxu0 0
    %670 = vmatmul.mubr.bf16.gmra.mxu0 %v635
    %v671 = vpop.f32.mrf.mxu0
    %v672 = vadd.f32 %v607, %v671
    %v673 = vpop.f32.mrf.mxu0
    %v674 = vpop.f32.mrf.mxu0
    %v675 = vadd.f32 %v607, %v674
    %v676 = vpop.f32.mrf.mxu0
    %677 = vdwg.mxu0
    %v678 = vmax.f32 %v672, 0.0
    %v679 = vmax.f32 %v675, 0.0
    %v680 = vpack.c.bf16 %v679, %v678
    %v681 = vld [vmem:[#allocation15] sm:$0xf]
    %v682 = vld [vmem:[#allocation15 + $0x4] sm:$0xf]
    %v683 = vld [vmem:[#allocation15 + $0x8] sm:$0xf]
    %v684 = vld [vmem:[#allocation15 + $0xc] sm:$0xf]
    %v685 = vld [vmem:[#allocation15 + $0x10] sm:$0xf]
    %v686 = vld [vmem:[#allocation15 + $0x14] sm:$0xf]
    %v687 = vld [vmem:[#allocation15 + $0x18] sm:$0xf]
    %v688 = vld [vmem:[#allocation15 + $0x1c] sm:$0xf]
    %v689 = vld [vmem:[%s14] sm:$0x1]
    %v691 = vlaneseq
    %v692 = vshrl.u32 %v691, 7
    %v693 = vsub.s32 0, %v692
    %v694 = vrot.slane %v689, %v693
    %v704 = vunpack.c.l.b16 %v681
    %v705 = vunpack.c.l.b16 %v682
    %v706 = vunpack.c.l.b16 %v683
    %v707 = vunpack.c.l.b16 %v684
    %v708 = vunpack.c.l.b16 %v685
    %v709 = vunpack.c.l.b16 %v686
    %v710 = vunpack.c.l.b16 %v687
    %v711 = vunpack.c.l.b16 %v688
    %v712 = vpack.c.b16 %v705, %v704
    %v713 = vpack.c.b16 %v707, %v706
    %v714 = vpack.c.b16 %v709, %v708
    %v715 = vpack.c.b16 %v711, %v710
    %v721 = vsel %vm633, %v680, 0
    %723 = vmatprep.subr.bf16.mxu0 0
    %724 = vmatpush1.bf16.msra.mxu0 0
    %725 = vmatprep.subr.bf16.mxu0 0
    %726 = vmatpush1.bf16.msra.mxu0 0
    %727 = vmatprep.subr.bf16.mxu0 0
    %728 = vmatpush1.bf16.msra.mxu0 0
    %729 = vmatprep.subr.bf16.mxu0 0
    %730 = vmatpush1.bf16.msra.mxu0 0
    %731 = vmatprep.subr.bf16.mxu0 0
    %732 = vmatpush1.bf16.msra.mxu0 %v715
    %733 = vmatprep.subr.bf16.mxu0 0
    %734 = vmatpush1.bf16.msra.mxu0 %v714
    %735 = vmatprep.subr.bf16.mxu0 0
    %736 = vmatpush1.bf16.msra.mxu0 %v713
    %737 = vmatprep.subr.bf16.mxu0 0
    %738 = vmatpush1.bf16.msra.mxu0 %v712
    %739 = vmatprep.subr.bf16.mxu0 0
    %740 = vmatpush2.bf16.msra.mxu0 0
    %741 = vmatprep.subr.bf16.mxu0 0
    %742 = vmatpush2.bf16.msra.mxu0 0
    %743 = vmatprep.subr.bf16.mxu0 0
    %744 = vmatpush2.bf16.msra.mxu0 0
    %745 = vmatprep.subr.bf16.mxu0 0
    %746 = vmatpush2.bf16.msra.mxu0 0
    %747 = vmatprep.subr.bf16.mxu0 0
    %748 = vmatpush2.bf16.msra.mxu0 0
    %749 = vmatprep.subr.bf16.mxu0 0
    %750 = vmatpush2.bf16.msra.mxu0 0
    %751 = vmatprep.subr.bf16.mxu0 0
    %752 = vmatpush2.bf16.msra.mxu0 0
    %753 = vmatprep.subr.bf16.mxu0 0
    %754 = vmatpush2.bf16.msra.mxu0 0
    %755 = vmatprep.mubr.bf16.mxu0 0
    %756 = vmatmul.mubr.bf16.gmra.mxu0 %v721
    %v757 = vpop.f32.mrf.mxu0
    %v758 = vadd.f32 %v694, %v757
    %v759 = vpop.f32.mrf.mxu0
    %v760 = vpop.f32.mrf.mxu0
    %v761 = vadd.f32 %v694, %v760
    %v762 = vpop.f32.mrf.mxu0
    %763 = vdwg.mxu0
    %v764 = vmax.f32 %v758, 0.0
    %v765 = vmax.f32 %v761, 0.0
    %v766 = vld [vmem:[%s15] sm:$0x1]
    %v767 = vpack.c.bf16 %v765, %v764
    %v768 = vld [vmem:[#allocation2] sm:$0x1]
    %770 = vset.pattern.permute.xlu0 0
    %771 = vperm.xlu0 %770, %v768
    %v772 = vpop.permute.xlu0 %771
    %v774 = vlaneseq
    %v775 = vshrl.u32 %v774, 7
    %v776 = vsub.s32 0, %v775
    %v777 = vrot.slane %v772, %v776
    %v779 = vsel %vm633, %v766, 0
    %v782 = vsel %vm633, %v767, 0
    %784 = vmatprep.subr.bf16.mxu0 0
    %785 = vmatpush1.bf16.xpose.msra.mxu0 0
    %786 = vmatprep.subr.bf16.mxu0 0
    %787 = vmatpush1.bf16.xpose.msra.mxu0 0
    %788 = vmatprep.subr.bf16.mxu0 0
    %789 = vmatpush1.bf16.xpose.msra.mxu0 0
    %790 = vmatprep.subr.bf16.mxu0 0
    %791 = vmatpush1.bf16.xpose.msra.mxu0 0
    %792 = vmatprep.subr.bf16.mxu0 0
    %793 = vmatpush1.bf16.xpose.msra.mxu0 0
    %794 = vmatprep.subr.bf16.mxu0 0
    %795 = vmatpush1.bf16.xpose.msra.mxu0 0
    %796 = vmatprep.subr.bf16.mxu0 0
    %797 = vmatpush1.bf16.xpose.msra.mxu0 0
    %798 = vmatprep.subr.bf16.mxu0 0
    %799 = vmatpush1.bf16.xpose.msra.mxu0 %v782
    %800 = vmatprep.subr.bf16.mxu0 0
    %801 = vmatpush2.bf16.xpose.msra.mxu0 0
    %802 = vmatprep.subr.bf16.mxu0 0
    %803 = vmatpush2.bf16.xpose.msra.mxu0 0
    %804 = vmatprep.subr.bf16.mxu0 0
    %805 = vmatpush2.bf16.xpose.msra.mxu0 0
    %806 = vmatprep.subr.bf16.mxu0 0
    %807 = vmatpush2.bf16.xpose.msra.mxu0 0
    %808 = vmatprep.subr.bf16.mxu0 0
    %809 = vmatpush2.bf16.xpose.msra.mxu0 0
    %810 = vmatprep.subr.bf16.mxu0 0
    %811 = vmatpush2.bf16.xpose.msra.mxu0 0
    %812 = vmatprep.subr.bf16.mxu0 0
    %813 = vmatpush2.bf16.xpose.msra.mxu0 0
    %814 = vmatprep.subr.bf16.mxu0 0
    %815 = vmatpush2.bf16.xpose.msra.mxu0 0
    %816 = vmatprep.mubr.bf16.mxu0 0
    %817 = vmatmul.mubr.bf16.gmra.mxu0 %v779
    %v818 = vpop.f32.mrf.mxu0
    %v819 = vadd.f32 %v777, %v818
    %v820 = vpop.f32.mrf.mxu0
    %v821 = vpop.f32.mrf.mxu0
    %v822 = vpop.f32.mrf.mxu0
    %823 = vdwg.mxu0
    %vm824 = vcmask 122880
    %825 = vst.msk [vmem:[#allocation17] sm:$0x1] %vm824, %v819
    // Predicated region
    $region102: #{tpu_custom_call.1} parent=1 // pred_check
      _
    $region103: #{tpu_custom_call.1} parent=1 // pred_check_branch
      %827 = sbr.rel (0) target = $region105
    $region104: #{tpu_custom_call.1} parent=1 // pred_region
      %s829 = ssub.s32 16, 16
      %830 = vsyncadd [#allocation5], %s829
      %s832 = sshll.u32 [#allocation17], 4
      %s833 = int_to_ptr.vmem [resolvable:$true] %s832
      %835 = dma.vmem_to_hbm [thread:$0]  %s833, 16, %s17, [#allocation5]
    $region105: #{tpu_custom_call.1} parent=1 // pred_fallthru
      _
    // Predicated region
    $region106: #{tpu_custom_call.1} parent=1 // pred_check
      _
    $region107: #{tpu_custom_call.1} parent=1 // pred_check_branch
      %837 = sbr.rel (0) target = $region109
    $region108: #{tpu_custom_call.1} parent=1 // pred_region
      %838 = dma.done [#allocation5], 16
    $region109: #{tpu_custom_call.1} parent=1 // pred_fallthru
      _
    %839 = vsyncpa [#allocation4], 1
    %840 = vsyncpa [#allocation7], 1
    %841 = vsyncpa [#allocation10], 1
    %842 = vsyncpa [#allocation13], 1
    %843 = vsyncpa [#allocation16], 1
    %844 = vsyncpa [#allocation5], 1

</llo_original>
